<compile_context>
chip_gen: v6e
topology: v6e:2x2x1
jax: 0.10.0
libtpu: 0.0.40
codegen_flags: <defaults>
</compile_context>

<pallas_src>
import functools

import jax
import jax.numpy as jnp
from jax import lax
from jax.experimental import pallas as pl
from jax.experimental.pallas import tpu as pltpu


# --------------------------------------------------------------------------- kernel
def _policy_kernel(obs_ref, g_ref, w1_ref, b1_ref, w2_ref, b2_ref, w3_ref, b3_ref,
                   act_ref, logp_ref, m_sc, s_sc, logits_sc,
                   *, batch, tile_b, n_tiles, act_dim, tanh_bf16):
    t = pl.program_id(0)

    # ---- MLP for this batch tile; transposed layout: features on sublanes, batch on lanes.
    x = obs_ref[...].astype(jnp.bfloat16)                               # [TB, obs_dim]
    # w1 @ x.T without materializing an HBM transpose (trans-B contraction on the MXU).
    h = lax.dot_general(w1_ref[...], x, (((1,), (1,)), ((), ())),
                        preferred_element_type=jnp.float32) + b1_ref[...]   # [H, TB] f32
    h = jnp.tanh(h.astype(jnp.bfloat16)) if tanh_bf16 else jnp.tanh(h).astype(jnp.bfloat16)
    h = jnp.dot(w2_ref[...], h, preferred_element_type=jnp.float32) + b2_ref[...]
    h = jnp.tanh(h.astype(jnp.bfloat16)) if tanh_bf16 else jnp.tanh(h).astype(jnp.bfloat16)
    out = jnp.dot(w3_ref[...], h, preferred_element_type=jnp.float32) + b3_ref[...]  # [A, TB]

    # ---- cache logits in VMEM: the sampling epilogue needs no MLP recompute / HBM trip.
    logits_sc[t] = out

    # ---- online logsumexp over the batch (lane) axis; padded columns masked out.
    @pl.when(t == 0)
    def _():
        m_sc[...] = jnp.full(m_sc.shape, -jnp.inf, m_sc.dtype)
        s_sc[...] = jnp.zeros(s_sc.shape, s_sc.dtype)

    col_idx = t * tile_b + lax.broadcasted_iota(jnp.int32, (1, tile_b), 1)
    out_m = jnp.where(col_idx < batch, out, -jnp.inf)
    m_old = m_sc[...]
    m_new = jnp.maximum(m_old, jnp.max(out_m, axis=1, keepdims=True))
    s_sc[...] = (s_sc[...] * jnp.exp(m_old - m_new)
                 + jnp.sum(jnp.exp(out_m - m_new), axis=1, keepdims=True))
    m_sc[...] = m_new

    # ---- last tile: finalize norm, then sample every tile from the cached logits
    #      (static slices -> unmasked lane-dense [1, tile_b] stores).
    @pl.when(t == pl.num_programs(0) - 1)
    def _():
        norm = m_sc[...] + jnp.log(s_sc[...])                           # logsumexp_b out[a,:]
        for i in range(n_tiles):                                        # static unroll
            sl = slice(i * tile_b, (i + 1) * tile_b)
            col = logits_sc[i] - norm                                   # log softmax(dim=batch)
            row_max = jnp.max(col, axis=0, keepdims=True)
            lse = row_max + jnp.log(jnp.sum(jnp.exp(col - row_max), axis=0, keepdims=True))
            # Gumbel-max over actions; the per-sample constant lse is dropped from the score.
            z = col + g_ref[:, sl]
            z_max = jnp.max(z, axis=0, keepdims=True)
            a_iota = lax.broadcasted_iota(jnp.int32, z.shape, 0)
            action = jnp.min(jnp.where(z == z_max, a_iota, act_dim), axis=0, keepdims=True)
            picked = a_iota == action
            act_ref[:, sl] = action
            logp_ref[:, sl] = (jnp.sum(jnp.where(picked, col, 0.0), axis=0, keepdims=True)
                               - lse)


# --------------------------------------------------------------------------- wrappers
def _policy_pallas(obs_pad, gumbel, w, b, *, batch, tile_b, tanh_bf16):
    b_pad, obs_dim = obs_pad.shape
    act_dim = w[2].shape[0]
    n_tiles = b_pad // tile_b

    kernel = functools.partial(_policy_kernel, batch=batch, tile_b=tile_b,
                               n_tiles=n_tiles, act_dim=act_dim, tanh_bf16=tanh_bf16)

    in_specs = [pl.BlockSpec((tile_b, obs_dim), lambda t: (t, 0)),      # obs tile, natural layout
                pl.BlockSpec((act_dim, b_pad), lambda t: (0, 0))]       # gumbel noise, resident
    for arr in (w[0], b[0], w[1], b[1], w[2], b[2]):                    # resident weights/biases
        in_specs.append(pl.BlockSpec(arr.shape, lambda t: (0, 0)))
    out_specs = (pl.BlockSpec((1, b_pad), lambda t: (0, 0)),            # action row, lane-dense
                 pl.BlockSpec((1, b_pad), lambda t: (0, 0)))            # logp row,   lane-dense

    return pl.pallas_call(
        kernel,
        out_shape=(jax.ShapeDtypeStruct((1, b_pad), jnp.int32),
                   jax.ShapeDtypeStruct((1, b_pad), jnp.float32)),
        grid=(n_tiles,),
        in_specs=in_specs,
        out_specs=out_specs,
        scratch_shapes=[pltpu.VMEM((act_dim, 1), jnp.float32),              # running max
                        pltpu.VMEM((act_dim, 1), jnp.float32),              # running sum-exp
                        pltpu.VMEM((n_tiles, act_dim, tile_b), jnp.float32)],  # cached logits
        compiler_params=pltpu.CompilerParams(
            dimension_semantics=("arbitrary",)),      # sequential online batch reduction
    )(obs_pad, gumbel, w[0], b[0], w[1], b[1], w[2], b[2])


def _pick_tile(b_pad, tile_b=None):
    if tile_b is not None:
        assert b_pad % tile_b == 0, "tile_b must divide the padded batch"
        return tile_b
    if b_pad <= 8192:              # whole (padded) batch in one grid step: the common RL case
        return b_pad
    for cand in (8192, 4096, 2048, 1024, 512, 256, 128):
        if b_pad % cand == 0:
            return cand
    return 128                     # unreachable: b_pad is a multiple of 128


def _default_tanh_bf16():
    # bf16 tanh uses the bf16 EUP on v6e/v7x; v5e/v5p lack it -> keep f32 tanh there.
    try:
        kind = jax.devices()[0].device_kind.lower()
    except Exception:
        return True
    return "v5" not in kind


@functools.partial(jax.jit, static_argnames=("batch", "b_pad", "tile_b", "tanh_bf16"))
def _forward_impl(params, observation, key, *, batch, b_pad, tile_b, tanh_bf16):
    obs = observation.astype(jnp.float32)
    if b_pad != batch:
        obs = jnp.pad(obs, ((0, b_pad - batch), (0, 0)))                # pad ragged batch to x128
    act_dim = params["w3"].shape[0]
    gumbel = jax.random.gumbel(key, (act_dim, b_pad), jnp.float32)
    w = [params[f"w{i}"].astype(jnp.bfloat16) for i in (1, 2, 3)]       # [out, in] MXU operands
    b = [params[f"b{i}"].astype(jnp.float32) for i in (1, 2, 3)]        # [out, 1]  f32 biases
    act_row, logp_row = _policy_pallas(obs, gumbel, w, b, batch=batch,
                                       tile_b=tile_b, tanh_bf16=tanh_bf16)
    return (act_row[0, :batch].reshape(batch, 1),
            logp_row[0, :batch].reshape(batch, 1))


def categorical_policy_forward(params, observation, seed, tile_b=None, tanh_bf16=None):
    """Reproduces CategoricalPolicy.forward: returns (action [B,1] int32, logp [B,1] f32)."""
    batch = observation.shape[0]
    b_pad = ((batch + 127) // 128) * 128
    tile_b = _pick_tile(b_pad, tile_b)
    if tanh_bf16 is None:
        tanh_bf16 = _default_tanh_bf16()
    # TODO(synk): torch's dist.sample() uses torch's global RNG; here jax.random Gumbel noise
    #             drives a Gumbel-max sample (same distribution, different random stream).
    key = jax.random.PRNGKey(seed)
    return _forward_impl(params, observation, key, batch=batch, b_pad=b_pad,
                         tile_b=tile_b, tanh_bf16=tanh_bf16)


# ------------------------------------------------------------------ params / reference
def init_params(key, network_dims):
    """Synthetic Linear params in the transposed layout: W [out, in], b [out, 1]."""
    params = {}
    ks = jax.random.split(key, len(network_dims) - 1)
    for i, (d_in, d_out) in enumerate(zip(network_dims[:-1], network_dims[1:])):
        kw, kb = jax.random.split(ks[i])
        params[f"w{i + 1}"] = jax.random.normal(kw, (d_out, d_in), jnp.float32) * 0.1
        params[f"b{i + 1}"] = jax.random.normal(kb, (d_out, 1), jnp.float32) * 0.01
    return params


def _lse(x, axis):
    m = jnp.max(x, axis=axis, keepdims=True)
    return m + jnp.log(jnp.sum(jnp.exp(x - m), axis=axis, keepdims=True))


def _reference_logp_all(observation, params, tanh_bf16):
    """Pure-JAX reference of log Categorical probs, [B, A] (mirrors the kernel's dtypes)."""
    bf = jnp.bfloat16
    act = ((lambda v: jnp.tanh(v.astype(bf))) if tanh_bf16
           else (lambda v: jnp.tanh(v).astype(bf)))
    x = observation.astype(bf)                                           # [B, obs]
    h = lax.dot_general(params["w1"].astype(bf), x, (((1,), (1,)), ((), ())),
                        preferred_element_type=jnp.float32) + params["b1"]
    h = act(h)
    h = jnp.dot(params["w2"].astype(bf), h, preferred_element_type=jnp.float32) + params["b2"]
    h = act(h)
    out = jnp.dot(params["w3"].astype(bf), h, preferred_element_type=jnp.float32) + params["b3"]
    col = out - _lse(out, axis=1)          # log F.softmax(net(obs)[:, None], dim=0)
    logp = col - _lse(col, axis=0)         # Categorical(probs) renormalization over actions
    return logp.T                          # [B, A]


if __name__ == "__main__":
    network_dims = [16, 32, 32, 8]          # [obs_dim, hidden, hidden, act_dim]
    batch = 8
    act_dim = network_dims[-1]

    root = jax.random.PRNGKey(0)
    k_obs, k_params = jax.random.split(root)
    observation = jax.random.normal(k_obs, (batch, network_dims[0]), jnp.float32)
    params = init_params(k_params, network_dims)
    tanh_bf16 = _default_tanh_bf16()

    # Small ragged batch (padded to 128, single-tile fused path).
    action, log_probs = categorical_policy_forward(params, observation, seed=1234,
                                                   tanh_bf16=tanh_bf16)
    action = jax.block_until_ready(action)
    log_probs = jax.block_until_ready(log_probs)

    assert action.shape == (batch, 1) and log_probs.shape == (batch, 1)
    assert bool(jnp.all((action >= 0) & (action < act_dim)))
    ref_logp_all = _reference_logp_all(observation, params, tanh_bf16)   # [B, A]
    ref_sel = jnp.take_along_axis(ref_logp_all, action, axis=-1)         # [B, 1]
    assert jnp.allclose(log_probs, ref_sel, atol=2e-2, rtol=1e-3)
    assert bool(jnp.all(jnp.isfinite(log_probs)))
    assert bool(jnp.all(log_probs <= 1e-5))

    # Multi-tile path: exercises the cross-tile online logsumexp + cached-logit epilogue.
    big_b = 256
    obs_big = jax.random.normal(jax.random.PRNGKey(1), (big_b, network_dims[0]), jnp.float32)
    a_big, lp_big = categorical_policy_forward(params, obs_big, seed=7, tile_b=128,
                                               tanh_bf16=tanh_bf16)
    a_big = jax.block_until_ready(a_big)
    lp_big = jax.block_until_ready(lp_big)
    assert a_big.shape == (big_b, 1) and lp_big.shape == (big_b, 1)
    assert bool(jnp.all((a_big >= 0) & (a_big < act_dim)))
    ref_big = _reference_logp_all(obs_big, params, tanh_bf16)
    sel_big = jnp.take_along_axis(ref_big, a_big, axis=-1)
    assert jnp.allclose(lp_big, sel_big, atol=2e-2, rtol=1e-3)
    assert bool(jnp.all(jnp.isfinite(lp_big)))

    print("KERNEL_OK")
</pallas_src>

<mosaic_0001>
module attributes {stable_mosaic.version = 11 : i64} {
  func.func @_policy_kernel(%arg0: i32, %arg1: memref<128x16xf32, #tpu.memory_space<vmem>>, %arg2: memref<8x128xf32, #tpu.memory_space<vmem>>, %arg3: memref<32x16xbf16, #tpu.memory_space<vmem>>, %arg4: memref<32x1xf32, #tpu.memory_space<vmem>>, %arg5: memref<32x32xbf16, #tpu.memory_space<vmem>>, %arg6: memref<32x1xf32, #tpu.memory_space<vmem>>, %arg7: memref<8x32xbf16, #tpu.memory_space<vmem>>, %arg8: memref<8x1xf32, #tpu.memory_space<vmem>>, %arg9: memref<1x128xi32, #tpu.memory_space<vmem>>, %arg10: memref<1x128xf32, #tpu.memory_space<vmem>>, %arg11: memref<8x1xf32, #tpu.memory_space<vmem>>, %arg12: memref<8x1xf32, #tpu.memory_space<vmem>>, %arg13: memref<1x8x128xf32, #tpu.memory_space<vmem>>) attributes {dimension_semantics = [#tpu.dimension_semantics<arbitrary>], iteration_bounds = array<i64: 1>, scalar_prefetch = 0 : i64, scratch_operands = 3 : i64, tpu.core_type = #tpu.core_type<tc>, window_params = [{transform_indices = @transform_0, window_bounds = array<i64: 128, 16>}, {pipeline_mode = #tpu.pipeline_mode<synchronous>, transform_indices = @transform_1, window_bounds = array<i64: 8, 128>}, {pipeline_mode = #tpu.pipeline_mode<synchronous>, transform_indices = @transform_2, window_bounds = array<i64: 32, 16>}, {pipeline_mode = #tpu.pipeline_mode<synchronous>, transform_indices = @transform_3, window_bounds = array<i64: 32, 1>}, {pipeline_mode = #tpu.pipeline_mode<synchronous>, transform_indices = @transform_4, window_bounds = array<i64: 32, 32>}, {pipeline_mode = #tpu.pipeline_mode<synchronous>, transform_indices = @transform_5, window_bounds = array<i64: 32, 1>}, {pipeline_mode = #tpu.pipeline_mode<synchronous>, transform_indices = @transform_6, window_bounds = array<i64: 8, 32>}, {pipeline_mode = #tpu.pipeline_mode<synchronous>, transform_indices = @transform_7, window_bounds = array<i64: 8, 1>}, {pipeline_mode = #tpu.pipeline_mode<synchronous>, transform_indices = @transform_8, window_bounds = array<i64: 1, 128>}, {pipeline_mode = #tpu.pipeline_mode<synchronous>, transform_indices = @transform_9, window_bounds = array<i64: 1, 128>}]} {
    %c0 = arith.constant 0 : index
    %c0_0 = arith.constant 0 : index
    %0 = vector.load %arg1[%c0, %c0_0] : memref<128x16xf32, #tpu.memory_space<vmem>>, vector<128x16xf32>
    %1 = arith.truncf %0 : vector<128x16xf32> to vector<128x16xbf16>
    %c0_1 = arith.constant 0 : index
    %c0_2 = arith.constant 0 : index
    %2 = vector.load %arg3[%c0_1, %c0_2] : memref<32x16xbf16, #tpu.memory_space<vmem>>, vector<32x16xbf16>
    %cst = arith.constant dense<0.000000e+00> : vector<32x128xf32>
    %3 = tpu.matmul %2, %1, %cst {dimension_numbers = #tpu.dot_dimension_numbers<[1], [1], [0], [0], [0, 0, 1, 0], [], []>} : vector<32x16xbf16>, vector<128x16xbf16>, vector<32x128xf32> -> vector<32x128xf32>
    %c0_3 = arith.constant 0 : index
    %c0_4 = arith.constant 0 : index
    %4 = vector.load %arg4[%c0_3, %c0_4] : memref<32x1xf32, #tpu.memory_space<vmem>>, vector<32x1xf32>
    %5 = vector.broadcast %4 : vector<32x1xf32> to vector<32x128xf32>
    %6 = arith.addf %3, %5 : vector<32x128xf32>
    %7 = arith.truncf %6 : vector<32x128xf32> to vector<32x128xbf16>
    %8 = math.tanh %7 : vector<32x128xbf16>
    %c0_5 = arith.constant 0 : index
    %c0_6 = arith.constant 0 : index
    %9 = vector.load %arg5[%c0_5, %c0_6] : memref<32x32xbf16, #tpu.memory_space<vmem>>, vector<32x32xbf16>
    %cst_7 = arith.constant dense<0.000000e+00> : vector<32x128xf32>
    %10 = tpu.matmul %9, %8, %cst_7 {dimension_numbers = #tpu.dot_dimension_numbers<[1], [0], [0], [1], [0, 0, 1, 1], [], []>} : vector<32x32xbf16>, vector<32x128xbf16>, vector<32x128xf32> -> vector<32x128xf32>
    %c0_8 = arith.constant 0 : index
    %c0_9 = arith.constant 0 : index
    %11 = vector.load %arg6[%c0_8, %c0_9] : memref<32x1xf32, #tpu.memory_space<vmem>>, vector<32x1xf32>
    %12 = vector.broadcast %11 : vector<32x1xf32> to vector<32x128xf32>
    %13 = arith.addf %10, %12 : vector<32x128xf32>
    %14 = arith.truncf %13 : vector<32x128xf32> to vector<32x128xbf16>
    %15 = math.tanh %14 : vector<32x128xbf16>
    %c0_10 = arith.constant 0 : index
    %c0_11 = arith.constant 0 : index
    %16 = vector.load %arg7[%c0_10, %c0_11] : memref<8x32xbf16, #tpu.memory_space<vmem>>, vector<8x32xbf16>
    %cst_12 = arith.constant dense<0.000000e+00> : vector<8x128xf32>
    %17 = tpu.matmul %16, %15, %cst_12 {dimension_numbers = #tpu.dot_dimension_numbers<[1], [0], [0], [1], [0, 0, 1, 1], [], []>} : vector<8x32xbf16>, vector<32x128xbf16>, vector<8x128xf32> -> vector<8x128xf32>
    %c0_13 = arith.constant 0 : index
    %c0_14 = arith.constant 0 : index
    %18 = vector.load %arg8[%c0_13, %c0_14] : memref<8x1xf32, #tpu.memory_space<vmem>>, vector<8x1xf32>
    %19 = vector.broadcast %18 : vector<8x1xf32> to vector<8x128xf32>
    %20 = arith.addf %17, %19 : vector<8x128xf32>
    %21 = arith.index_cast %arg0 : i32 to index
    %c0_15 = arith.constant 0 : index
    %c0_16 = arith.constant 0 : index
    %22 = vector.load %arg13[%21, %c0_15, %c0_16] : memref<1x8x128xf32, #tpu.memory_space<vmem>>, vector<1x8x128xf32>
    %23 = vector.shape_cast %22 : vector<1x8x128xf32> to vector<8x128xf32>
    %24 = vector.shape_cast %20 : vector<8x128xf32> to vector<1x8x128xf32>
    tpu.vector_store %arg13[%21, %c0_15, %c0_16], %24 {strides = array<i32>} : memref<1x8x128xf32, #tpu.memory_space<vmem>>, vector<1x8x128xf32>,
    %c0_i32 = arith.constant 0 : i32
    %25 = arith.cmpi eq, %arg0, %c0_i32 : i32
    %26 = arith.extui %25 : i1 to i32
    %c0_i32_17 = arith.constant 0 : i32
    %27 = arith.cmpi ne, %26, %c0_i32_17 : i32
    scf.if %27 {
      %cst_31 = arith.constant 0xFF800000 : f32
      %57 = vector.broadcast %cst_31 : f32 to vector<8x1xf32>
      %c0_32 = arith.constant 0 : index
      %c0_33 = arith.constant 0 : index
      %58 = vector.load %arg11[%c0_32, %c0_33] : memref<8x1xf32, #tpu.memory_space<vmem>>, vector<8x1xf32>
      tpu.vector_store %arg11[%c0_32, %c0_33], %57 {strides = array<i32>} : memref<8x1xf32, #tpu.memory_space<vmem>>, vector<8x1xf32>,
      %cst_34 = arith.constant 0.000000e+00 : f32
      %59 = vector.broadcast %cst_34 : f32 to vector<8x1xf32>
      %c0_35 = arith.constant 0 : index
      %c0_36 = arith.constant 0 : index
      %60 = vector.load %arg12[%c0_35, %c0_36] : memref<8x1xf32, #tpu.memory_space<vmem>>, vector<8x1xf32>
      tpu.vector_store %arg12[%c0_35, %c0_36], %59 {strides = array<i32>} : memref<8x1xf32, #tpu.memory_space<vmem>>, vector<8x1xf32>,
    } else {
    }
    %c128_i32 = arith.constant 128 : i32
    %28 = arith.muli %arg0, %c128_i32 : i32
    %29 = tpu.iota {dimensions = array<i32: 1>} : vector<1x128xi32>
    %30 = vector.broadcast %28 : i32 to vector<1x128xi32>
    %31 = arith.addi %30, %29 : vector<1x128xi32>
    %c8_i32 = arith.constant 8 : i32
    %32 = vector.broadcast %c8_i32 : i32 to vector<1x128xi32>
    %33 = arith.cmpi slt, %31, %32 : vector<1x128xi32>
    %cst_18 = arith.constant 0xFF800000 : f32
    %34 = vector.shape_cast %33 : vector<1x128xi1> to vector<1x128xi1>
    %35 = vector.broadcast %34 : vector<1x128xi1> to vector<8x128xi1>
    %36 = vector.broadcast %cst_18 : f32 to vector<8x128xf32>
    %37 = arith.select %35, %20, %36 : vector<8x128xi1>, vector<8x128xf32>
    %c0_19 = arith.constant 0 : index
    %c0_20 = arith.constant 0 : index
    %38 = vector.load %arg11[%c0_19, %c0_20] : memref<8x1xf32, #tpu.memory_space<vmem>>, vector<8x1xf32>
    %cst_21 = arith.constant dense<0xFF800000> : vector<8xf32>
    %39 = vector.multi_reduction <maximumf>, %37, %cst_21 [1] : vector<8x128xf32> to vector<8xf32>
    %40 = vector.shape_cast %39 : vector<8xf32> to vector<8x1xf32>
    %41 = arith.maximumf %38, %40 : vector<8x1xf32>
    %c0_22 = arith.constant 0 : index
    %c0_23 = arith.constant 0 : index
    %42 = vector.load %arg12[%c0_22, %c0_23] : memref<8x1xf32, #tpu.memory_space<vmem>>, vector<8x1xf32>
    %43 = arith.subf %38, %41 : vector<8x1xf32>
    %44 = math.exp %43 : vector<8x1xf32>
    %45 = arith.mulf %42, %44 : vector<8x1xf32>
    %46 = vector.broadcast %41 : vector<8x1xf32> to vector<8x128xf32>
    %47 = arith.subf %37, %46 : vector<8x128xf32>
    %48 = math.exp %47 : vector<8x128xf32>
    %cst_24 = arith.constant dense<0.000000e+00> : vector<8xf32>
    %49 = vector.multi_reduction <add>, %48, %cst_24 [1] : vector<8x128xf32> to vector<8xf32>
    %50 = vector.shape_cast %49 : vector<8xf32> to vector<8x1xf32>
    %51 = arith.addf %45, %50 : vector<8x1xf32>
    %c0_25 = arith.constant 0 : index
    %c0_26 = arith.constant 0 : index
    %52 = vector.load %arg12[%c0_25, %c0_26] : memref<8x1xf32, #tpu.memory_space<vmem>>, vector<8x1xf32>
    tpu.vector_store %arg12[%c0_25, %c0_26], %51 {strides = array<i32>} : memref<8x1xf32, #tpu.memory_space<vmem>>, vector<8x1xf32>,
    %c0_27 = arith.constant 0 : index
    %c0_28 = arith.constant 0 : index
    %53 = vector.load %arg11[%c0_27, %c0_28] : memref<8x1xf32, #tpu.memory_space<vmem>>, vector<8x1xf32>
    tpu.vector_store %arg11[%c0_27, %c0_28], %41 {strides = array<i32>} : memref<8x1xf32, #tpu.memory_space<vmem>>, vector<8x1xf32>,
    %c0_i32_29 = arith.constant 0 : i32
    %54 = arith.cmpi eq, %arg0, %c0_i32_29 : i32
    %55 = arith.extui %54 : i1 to i32
    %c0_i32_30 = arith.constant 0 : i32
    %56 = arith.cmpi ne, %55, %c0_i32_30 : i32
    scf.if %56 {
      %c0_31 = arith.constant 0 : index
      %c0_32 = arith.constant 0 : index
      %57 = vector.load %arg11[%c0_31, %c0_32] : memref<8x1xf32, #tpu.memory_space<vmem>>, vector<8x1xf32>
      %c0_33 = arith.constant 0 : index
      %c0_34 = arith.constant 0 : index
      %58 = vector.load %arg12[%c0_33, %c0_34] : memref<8x1xf32, #tpu.memory_space<vmem>>, vector<8x1xf32>
      %59 = math.log %58 : vector<8x1xf32>
      %60 = arith.addf %57, %59 : vector<8x1xf32>
      %c0_35 = arith.constant 0 : index
      %c0_36 = arith.constant 0 : index
      %c0_37 = arith.constant 0 : index
      %61 = vector.load %arg13[%c0_35, %c0_36, %c0_37] : memref<1x8x128xf32, #tpu.memory_space<vmem>>, vector<1x8x128xf32>
      %62 = vector.shape_cast %61 : vector<1x8x128xf32> to vector<8x128xf32>
      %63 = vector.broadcast %60 : vector<8x1xf32> to vector<8x128xf32>
      %64 = arith.subf %62, %63 : vector<8x128xf32>
      %cst_38 = arith.constant dense<0xFF800000> : vector<128xf32>
      %65 = vector.multi_reduction <maximumf>, %64, %cst_38 [0] : vector<8x128xf32> to vector<128xf32>
      %66 = vector.shape_cast %65 : vector<128xf32> to vector<1x128xf32>
      %67 = vector.broadcast %66 : vector<1x128xf32> to vector<8x128xf32>
      %68 = arith.subf %64, %67 : vector<8x128xf32>
      %69 = math.exp %68 : vector<8x128xf32>
      %cst_39 = arith.constant dense<0.000000e+00> : vector<128xf32>
      %70 = vector.multi_reduction <add>, %69, %cst_39 [0] : vector<8x128xf32> to vector<128xf32>
      %71 = vector.shape_cast %70 : vector<128xf32> to vector<1x128xf32>
      %72 = math.log %71 : vector<1x128xf32>
      %73 = arith.addf %66, %72 : vector<1x128xf32>
      %c0_40 = arith.constant 0 : index
      %c0_41 = arith.constant 0 : index
      %74 = vector.load %arg2[%c0_40, %c0_41] : memref<8x128xf32, #tpu.memory_space<vmem>>, vector<8x128xf32>
      %75 = arith.addf %64, %74 : vector<8x128xf32>
      %cst_42 = arith.constant dense<0xFF800000> : vector<128xf32>
      %76 = vector.multi_reduction <maximumf>, %75, %cst_42 [0] : vector<8x128xf32> to vector<128xf32>
      %77 = vector.shape_cast %76 : vector<128xf32> to vector<1x128xf32>
      %78 = tpu.iota {dimensions = array<i32: 0>} : vector<8x128xi32>
      %79 = vector.broadcast %77 : vector<1x128xf32> to vector<8x128xf32>
      %80 = arith.cmpf oeq, %75, %79 : vector<8x128xf32>
      %c8_i32_43 = arith.constant 8 : i32
      %81 = vector.broadcast %c8_i32_43 : i32 to vector<8x128xi32>
      %82 = arith.select %80, %78, %81 : vector<8x128xi1>, vector<8x128xi32>
      %cst_44 = arith.constant dense<2147483647> : vector<128xi32>
      %83 = vector.multi_reduction <minsi>, %82, %cst_44 [0] : vector<8x128xi32> to vector<128xi32>
      %84 = vector.shape_cast %83 : vector<128xi32> to vector<1x128xi32>
      %85 = vector.broadcast %84 : vector<1x128xi32> to vector<8x128xi32>
      %86 = arith.cmpi eq, %78, %85 : vector<8x128xi32>
      %c0_45 = arith.constant 0 : index
      %c0_46 = arith.constant 0 : index
      %87 = vector.load %arg9[%c0_45, %c0_46] : memref<1x128xi32, #tpu.memory_space<vmem>>, vector<1x128xi32>
      tpu.vector_store %arg9[%c0_45, %c0_46], %84 {strides = array<i32>} : memref<1x128xi32, #tpu.memory_space<vmem>>, vector<1x128xi32>,
      %cst_47 = arith.constant 0.000000e+00 : f32
      %88 = vector.broadcast %cst_47 : f32 to vector<8x128xf32>
      %89 = arith.select %86, %64, %88 : vector<8x128xi1>, vector<8x128xf32>
      %cst_48 = arith.constant dense<0.000000e+00> : vector<128xf32>
      %90 = vector.multi_reduction <add>, %89, %cst_48 [0] : vector<8x128xf32> to vector<128xf32>
      %91 = vector.shape_cast %90 : vector<128xf32> to vector<1x128xf32>
      %92 = arith.subf %91, %73 : vector<1x128xf32>
      %c0_49 = arith.constant 0 : index
      %c0_50 = arith.constant 0 : index
      %93 = vector.load %arg10[%c0_49, %c0_50] : memref<1x128xf32, #tpu.memory_space<vmem>>, vector<1x128xf32>
      tpu.vector_store %arg10[%c0_49, %c0_50], %92 {strides = array<i32>} : memref<1x128xf32, #tpu.memory_space<vmem>>, vector<1x128xf32>,
    } else {
    }
    return
  }
  func.func @transform_0(%arg0: i32) -> (i32, i32) {
    %c0_i32 = arith.constant 0 : i32
    %c0_i32_0 = arith.constant 0 : i32
    return %arg0, %c0_i32 : i32, i32
  }
  func.func @transform_1(%arg0: i32) -> (i32, i32) {
    %c0_i32 = arith.constant 0 : i32
    %c0_i32_0 = arith.constant 0 : i32
    %c0_i32_1 = arith.constant 0 : i32
    return %c0_i32, %c0_i32_0 : i32, i32
  }
  func.func @transform_2(%arg0: i32) -> (i32, i32) {
    %c0_i32 = arith.constant 0 : i32
    %c0_i32_0 = arith.constant 0 : i32
    %c0_i32_1 = arith.constant 0 : i32
    return %c0_i32, %c0_i32_0 : i32, i32
  }
  func.func @transform_3(%arg0: i32) -> (i32, i32) {
    %c0_i32 = arith.constant 0 : i32
    %c0_i32_0 = arith.constant 0 : i32
    %c0_i32_1 = arith.constant 0 : i32
    return %c0_i32, %c0_i32_0 : i32, i32
  }
  func.func @transform_4(%arg0: i32) -> (i32, i32) {
    %c0_i32 = arith.constant 0 : i32
    %c0_i32_0 = arith.constant 0 : i32
    %c0_i32_1 = arith.constant 0 : i32
    return %c0_i32, %c0_i32_0 : i32, i32
  }
  func.func @transform_5(%arg0: i32) -> (i32, i32) {
    %c0_i32 = arith.constant 0 : i32
    %c0_i32_0 = arith.constant 0 : i32
    %c0_i32_1 = arith.constant 0 : i32
    return %c0_i32, %c0_i32_0 : i32, i32
  }
  func.func @transform_6(%arg0: i32) -> (i32, i32) {
    %c0_i32 = arith.constant 0 : i32
    %c0_i32_0 = arith.constant 0 : i32
    %c0_i32_1 = arith.constant 0 : i32
    return %c0_i32, %c0_i32_0 : i32, i32
  }
  func.func @transform_7(%arg0: i32) -> (i32, i32) {
    %c0_i32 = arith.constant 0 : i32
    %c0_i32_0 = arith.constant 0 : i32
    %c0_i32_1 = arith.constant 0 : i32
    return %c0_i32, %c0_i32_0 : i32, i32
  }
  func.func @transform_8(%arg0: i32) -> (i32, i32) {
    %c0_i32 = arith.constant 0 : i32
    %c0_i32_0 = arith.constant 0 : i32
    %c0_i32_1 = arith.constant 0 : i32
    return %c0_i32, %c0_i32_0 : i32, i32
  }
  func.func @transform_9(%arg0: i32) -> (i32, i32) {
    %c0_i32 = arith.constant 0 : i32
    %c0_i32_0 = arith.constant 0 : i32
    %c0_i32_1 = arith.constant 0 : i32
    return %c0_i32, %c0_i32_0 : i32, i32
  }
}

</mosaic_0001>

<llo_original>
// kernel: _forward_impl.1
$region0: #{_forward_impl.1}
  #allocation0 [shape = 'u32[]', space=smem, size = 0x4, offset = 0x4, fixed_abs, tag = 'smem constant byte address 0x4 - core index']
  #allocation1 [shape = 'u32[144,128]{1,0:T(1,128)}', space=vmem, size = 0x12000, scoped, tag = 'internal scratch']
  #allocation2 [shape = 'f32[8,1]{1,0:T(8,128)}', space=vmem, size = 0x1000, scoped, tag = 'scratch operand']
  #allocation3 [shape = 'f32[8,1]{1,0:T(8,128)}', space=vmem, size = 0x1000, scoped, tag = 'scratch operand']
  #allocation4 [shape = 'f32[1,8,128]{2,1,0:T(8,128)}', space=vmem, size = 0x1000, scoped, tag = 'scratch operand']
  %s0 = inlined_call_operand.vmem [shape: f32[128,16], index: 0, kind: input, shape index: {}]
  %s1 = inlined_call_operand.vmem [shape: f32[8,128], index: 1, kind: input, shape index: {}]
  %s2 = inlined_call_operand.vmem [shape: bf16[32,16], index: 2, kind: input, shape index: {}]
  %s3 = inlined_call_operand.vmem [shape: f32[32,1], index: 3, kind: input, shape index: {}]
  %s4 = inlined_call_operand.vmem [shape: bf16[32,32], index: 4, kind: input, shape index: {}]
  %s5 = inlined_call_operand.vmem [shape: f32[32,1], index: 5, kind: input, shape index: {}]
  %s6 = inlined_call_operand.vmem [shape: bf16[8,32], index: 6, kind: input, shape index: {}]
  %s7 = inlined_call_operand.vmem [shape: f32[8,1], index: 7, kind: input, shape index: {}]
  %s8 = inlined_call_operand.vmem [shape: s32[1,128], index: 8, kind: output, shape index: {0}]
  %s9 = inlined_call_operand.vmem [shape: f32[1,128], index: 9, kind: output, shape index: {1}]
  %10 = xla_tuple %s8, %s9
  %s11 = sld [smem:[#allocation0]]
  $region58: #{_forward_impl.1} parent=0
    _
  %s13 = ssub.s32 1, %s11
  %s14 = scalar_select 0, %s13, %s11
  // Predicated region
  $region2: #{_forward_impl.1} parent=0 // pred_check
    _
  $region3: #{_forward_impl.1} parent=0 // pred_check_branch
    %16 = sbr.rel (0) target = $region5
  $region4: #{_forward_impl.1} parent=0 // pred_region
    _
  $region5: #{_forward_impl.1} parent=0 // pred_fallthru
    _
  // Predicated region
  $region6: #{_forward_impl.1} parent=0 // pred_check
    _
  $region7: #{_forward_impl.1} parent=0 // pred_check_branch
    %18 = sbr.rel (0) target = $region9
  $region8: #{_forward_impl.1} parent=0 // pred_region
    _
  $region9: #{_forward_impl.1} parent=0 // pred_fallthru
    _
  // Predicated region
  $region10: #{_forward_impl.1} parent=0 // pred_check
    _
  $region11: #{_forward_impl.1} parent=0 // pred_check_branch
    %20 = sbr.rel (0) target = $region13
  $region12: #{_forward_impl.1} parent=0 // pred_region
    _
  $region13: #{_forward_impl.1} parent=0 // pred_fallthru
    _
  // Predicated region
  $region14: #{_forward_impl.1} parent=0 // pred_check
    _
  $region15: #{_forward_impl.1} parent=0 // pred_check_branch
    %22 = sbr.rel (0) target = $region17
  $region16: #{_forward_impl.1} parent=0 // pred_region
    _
  $region17: #{_forward_impl.1} parent=0 // pred_fallthru
    _
  // Predicated region
  $region18: #{_forward_impl.1} parent=0 // pred_check
    _
  $region19: #{_forward_impl.1} parent=0 // pred_check_branch
    %24 = sbr.rel (0) target = $region21
  $region20: #{_forward_impl.1} parent=0 // pred_region
    _
  $region21: #{_forward_impl.1} parent=0 // pred_fallthru
    _
  // Predicated region
  $region22: #{_forward_impl.1} parent=0 // pred_check
    _
  $region23: #{_forward_impl.1} parent=0 // pred_check_branch
    %26 = sbr.rel (0) target = $region25
  $region24: #{_forward_impl.1} parent=0 // pred_region
    _
  $region25: #{_forward_impl.1} parent=0 // pred_fallthru
    _
  // Predicated region
  $region26: #{_forward_impl.1} parent=0 // pred_check
    _
  $region27: #{_forward_impl.1} parent=0 // pred_check_branch
    %28 = sbr.rel (0) target = $region29
  $region28: #{_forward_impl.1} parent=0 // pred_region
    _
  $region29: #{_forward_impl.1} parent=0 // pred_fallthru
    _
  // Predicated region
  $region30: #{_forward_impl.1} parent=0 // pred_check
    _
  $region31: #{_forward_impl.1} parent=0 // pred_check_branch
    %30 = sbr.rel (0) target = $region33
  $region32: #{_forward_impl.1} parent=0 // pred_region
    _
  $region33: #{_forward_impl.1} parent=0 // pred_fallthru
    _
  %v32 = vld [vmem:[%s0] sm:$0xff]
  %v33 = vld [vmem:[%s0 + $0x8] sm:$0xff]
  %v34 = vld [vmem:[%s0 + $0x10] sm:$0xff]
  %v35 = vld [vmem:[%s0 + $0x18] sm:$0xff]
  %v36 = vld [vmem:[%s0 + $0x20] sm:$0xff]
  %v37 = vld [vmem:[%s0 + $0x28] sm:$0xff]
  %v38 = vld [vmem:[%s0 + $0x30] sm:$0xff]
  %v39 = vld [vmem:[%s0 + $0x38] sm:$0xff]
  %v40 = vld [vmem:[%s0 + $0x40] sm:$0xff]
  %v41 = vld [vmem:[%s0 + $0x48] sm:$0xff]
  %v42 = vld [vmem:[%s0 + $0x50] sm:$0xff]
  %v43 = vld [vmem:[%s0 + $0x58] sm:$0xff]
  %v44 = vld [vmem:[%s0 + $0x60] sm:$0xff]
  %v45 = vld [vmem:[%s0 + $0x68] sm:$0xff]
  %v46 = vld [vmem:[%s0 + $0x70] sm:$0xff]
  %v47 = vld [vmem:[%s0 + $0x78] sm:$0xff]
  %v48 = vpack.c.bf16 %v33, %v32
  %v49 = vpack.c.bf16 %v35, %v34
  %v50 = vpack.c.bf16 %v37, %v36
  %v51 = vpack.c.bf16 %v39, %v38
  %v52 = vpack.c.bf16 %v41, %v40
  %v53 = vpack.c.bf16 %v43, %v42
  %v54 = vpack.c.bf16 %v45, %v44
  %v55 = vpack.c.bf16 %v47, %v46
  %v56 = vld [vmem:[%s2] sm:$0xf]
  %v57 = vld [vmem:[%s2 + $0x4] sm:$0xf]
  %v58 = vld [vmem:[%s2 + $0x8] sm:$0xf]
  %v59 = vld [vmem:[%s2 + $0xc] sm:$0xf]
  %v60 = vld [vmem:[%s3] sm:$0xff]
  %v61 = vld [vmem:[%s3 + $0x8] sm:$0xff]
  %v62 = vld [vmem:[%s3 + $0x10] sm:$0xff]
  %v63 = vld [vmem:[%s3 + $0x18] sm:$0xff]
  %65 = vset.pattern.permute.xlu0 0
  %66 = vperm.xlu0 %65, %v60
  %v67 = vpop.permute.xlu0 %66
  %70 = vset.pattern.permute.xlu0 0
  %71 = vperm.xlu0 %70, %v61
  %v72 = vpop.permute.xlu0 %71
  %75 = vset.pattern.permute.xlu0 0
  %76 = vperm.xlu0 %75, %v62
  %v77 = vpop.permute.xlu0 %76
  %80 = vset.pattern.permute.xlu0 0
  %81 = vperm.xlu0 %80, %v63
  %v82 = vpop.permute.xlu0 %81
  %v88 = vunpack.c.l.b16 %v56
  %v89 = vunpack.c.l.b16 %v57
  %v90 = vunpack.c.l.b16 %v58
  %v91 = vunpack.c.l.b16 %v59
  %v92 = vpack.c.b16 %v89, %v88
  %v93 = vpack.c.b16 %v91, %v90
  %vm94 = vcmask 130048
  %v96 = vsel %vm94, %v92, 0
  %v99 = vsel %vm94, %v93, 0
  %v102 = vsel %vm94, %v48, 0
  %v105 = vsel %vm94, %v49, 0
  %v108 = vsel %vm94, %v50, 0
  %v111 = vsel %vm94, %v51, 0
  %v114 = vsel %vm94, %v52, 0
  %v117 = vsel %vm94, %v53, 0
  %v120 = vsel %vm94, %v54, 0
  %v123 = vsel %vm94, %v55, 0
  %125 = vmatprep.subr.bf16.mxu0 0
  %126 = vmatpush1.bf16.xpose.msra.mxu0 %v123
  %127 = vmatprep.subr.bf16.mxu0 0
  %128 = vmatpush1.bf16.xpose.msra.mxu0 %v120
  %129 = vmatprep.subr.bf16.mxu0 0
  %130 = vmatpush1.bf16.xpose.msra.mxu0 %v117
  %131 = vmatprep.subr.bf16.mxu0 0
  %132 = vmatpush1.bf16.xpose.msra.mxu0 %v114
  %133 = vmatprep.subr.bf16.mxu0 0
  %134 = vmatpush1.bf16.xpose.msra.mxu0 %v111
  %135 = vmatprep.subr.bf16.mxu0 0
  %136 = vmatpush1.bf16.xpose.msra.mxu0 %v108
  %137 = vmatprep.subr.bf16.mxu0 0
  %138 = vmatpush1.bf16.xpose.msra.mxu0 %v105
  %139 = vmatprep.subr.bf16.mxu0 0
  %140 = vmatpush1.bf16.xpose.msra.mxu0 %v102
  %141 = vmatprep.subr.bf16.mxu0 0
  %142 = vmatpush2.bf16.xpose.msra.mxu0 0
  %143 = vmatprep.subr.bf16.mxu0 0
  %144 = vmatpush2.bf16.xpose.msra.mxu0 0
  %145 = vmatprep.subr.bf16.mxu0 0
  %146 = vmatpush2.bf16.xpose.msra.mxu0 0
  %147 = vmatprep.subr.bf16.mxu0 0
  %148 = vmatpush2.bf16.xpose.msra.mxu0 0
  %149 = vmatprep.subr.bf16.mxu0 0
  %150 = vmatpush2.bf16.xpose.msra.mxu0 0
  %151 = vmatprep.subr.bf16.mxu0 0
  %152 = vmatpush2.bf16.xpose.msra.mxu0 0
  %153 = vmatprep.subr.bf16.mxu0 0
  %154 = vmatpush2.bf16.xpose.msra.mxu0 0
  %155 = vmatprep.subr.bf16.mxu0 0
  %156 = vmatpush2.bf16.xpose.msra.mxu0 0
  %157 = vmatprep.mubr.bf16.mxu0 0
  %158 = vmatmul.mubr.bf16.gmra.mxu0 %v96
  %v159 = vpop.f32.mrf.mxu0
  %v160 = vadd.f32 %v67, %v159
  %v161 = vpop.f32.mrf.mxu0
  %v162 = vpop.f32.mrf.mxu0
  %v163 = vadd.f32 %v72, %v162
  %v164 = vpop.f32.mrf.mxu0
  %165 = vmatprep.mubr.bf16.mxu0 0
  %166 = vmatmul.mubr.bf16.gmra.mxu0 %v99
  %v167 = vpop.f32.mrf.mxu0
  %v168 = vadd.f32 %v77, %v167
  %v169 = vpop.f32.mrf.mxu0
  %v170 = vpop.f32.mrf.mxu0
  %v171 = vadd.f32 %v82, %v170
  %v172 = vpop.f32.mrf.mxu0
  %173 = vdwg.mxu0
  %v174 = vpack.c.bf16 %v163, %v160
  %v175 = vpack.c.bf16 %v171, %v168
  %v176 = vtanh.bf16.pop %v174
  %v177 = vtanh.bf16.pop %v175
  %v178 = vld [vmem:[%s4] sm:$0xf]
  %v179 = vld [vmem:[%s4 + $0x4] sm:$0xf]
  %v180 = vld [vmem:[%s4 + $0x8] sm:$0xf]
  %v181 = vld [vmem:[%s4 + $0xc] sm:$0xf]
  %v182 = vld [vmem:[%s5] sm:$0xff]
  %v183 = vld [vmem:[%s5 + $0x8] sm:$0xff]
  %v184 = vld [vmem:[%s5 + $0x10] sm:$0xff]
  %v185 = vld [vmem:[%s5 + $0x18] sm:$0xff]
  %187 = vset.pattern.permute.xlu0 0
  %188 = vperm.xlu0 %187, %v182
  %v189 = vpop.permute.xlu0 %188
  %192 = vset.pattern.permute.xlu0 0
  %193 = vperm.xlu0 %192, %v183
  %v194 = vpop.permute.xlu0 %193
  %197 = vset.pattern.permute.xlu0 0
  %198 = vperm.xlu0 %197, %v184
  %v199 = vpop.permute.xlu0 %198
  %202 = vset.pattern.permute.xlu0 0
  %203 = vperm.xlu0 %202, %v185
  %v204 = vpop.permute.xlu0 %203
  %v210 = vunpack.c.l.b16 %v178
  %v211 = vunpack.c.l.b16 %v179
  %v212 = vunpack.c.l.b16 %v180
  %v213 = vunpack.c.l.b16 %v181
  %v214 = vpack.c.b16 %v211, %v210
  %v215 = vpack.c.b16 %v213, %v212
  %vm216 = vcmask 261120
  %v218 = vsel %vm216, %v214, 0
  %v221 = vsel %vm216, %v215, 0
  %223 = vmatprep.subr.bf16.mxu0 0
  %224 = vmatpush1.bf16.msra.mxu0 0
  %225 = vmatprep.subr.bf16.mxu0 0
  %226 = vmatpush1.bf16.msra.mxu0 0
  %227 = vmatprep.subr.bf16.mxu0 0
  %228 = vmatpush1.bf16.msra.mxu0 0
  %229 = vmatprep.subr.bf16.mxu0 0
  %230 = vmatpush1.bf16.msra.mxu0 0
  %231 = vmatprep.subr.bf16.mxu0 0
  %232 = vmatpush1.bf16.msra.mxu0 0
  %233 = vmatprep.subr.bf16.mxu0 0
  %234 = vmatpush1.bf16.msra.mxu0 0
  %235 = vmatprep.subr.bf16.mxu0 0
  %236 = vmatpush1.bf16.msra.mxu0 %v177
  %237 = vmatprep.subr.bf16.mxu0 0
  %238 = vmatpush1.bf16.msra.mxu0 %v176
  %239 = vmatprep.subr.bf16.mxu0 0
  %240 = vmatpush2.bf16.msra.mxu0 0
  %241 = vmatprep.subr.bf16.mxu0 0
  %242 = vmatpush2.bf16.msra.mxu0 0
  %243 = vmatprep.subr.bf16.mxu0 0
  %244 = vmatpush2.bf16.msra.mxu0 0
  %245 = vmatprep.subr.bf16.mxu0 0
  %246 = vmatpush2.bf16.msra.mxu0 0
  %247 = vmatprep.subr.bf16.mxu0 0
  %248 = vmatpush2.bf16.msra.mxu0 0
  %249 = vmatprep.subr.bf16.mxu0 0
  %250 = vmatpush2.bf16.msra.mxu0 0
  %251 = vmatprep.subr.bf16.mxu0 0
  %252 = vmatpush2.bf16.msra.mxu0 0
  %253 = vmatprep.subr.bf16.mxu0 0
  %254 = vmatpush2.bf16.msra.mxu0 0
  %255 = vmatprep.mubr.bf16.mxu0 0
  %256 = vmatmul.mubr.bf16.gmra.mxu0 %v218
  %v257 = vpop.f32.mrf.mxu0
  %v258 = vadd.f32 %v189, %v257
  %v259 = vpop.f32.mrf.mxu0
  %v260 = vpop.f32.mrf.mxu0
  %v261 = vadd.f32 %v194, %v260
  %v262 = vpop.f32.mrf.mxu0
  %263 = vmatprep.mubr.bf16.mxu0 0
  %264 = vmatmul.mubr.bf16.gmra.mxu0 %v221
  %v265 = vpop.f32.mrf.mxu0
  %v266 = vadd.f32 %v199, %v265
  %v267 = vpop.f32.mrf.mxu0
  %v268 = vpop.f32.mrf.mxu0
  %v269 = vadd.f32 %v204, %v268
  %v270 = vpop.f32.mrf.mxu0
  %271 = vdwg.mxu0
  %v272 = vpack.c.bf16 %v261, %v258
  %v273 = vpack.c.bf16 %v269, %v266
  %v274 = vtanh.bf16.pop %v272
  %v275 = vtanh.bf16.pop %v273
  %v276 = vld [vmem:[%s6] sm:$0xf]
  %v277 = vld [vmem:[%s7] sm:$0xff]
  %279 = vset.pattern.permute.xlu0 0
  %280 = vperm.xlu0 %279, %v277
  %v281 = vpop.permute.xlu0 %280
  %v284 = vsel %vm216, %v276, 0
  %286 = vmatprep.subr.bf16.mxu0 0
  %287 = vmatpush1.bf16.msra.mxu0 0
  %288 = vmatprep.subr.bf16.mxu0 0
  %289 = vmatpush1.bf16.msra.mxu0 0
  %290 = vmatprep.subr.bf16.mxu0 0
  %291 = vmatpush1.bf16.msra.mxu0 0
  %292 = vmatprep.subr.bf16.mxu0 0
  %293 = vmatpush1.bf16.msra.mxu0 0
  %294 = vmatprep.subr.bf16.mxu0 0
  %295 = vmatpush1.bf16.msra.mxu0 0
  %296 = vmatprep.subr.bf16.mxu0 0
  %297 = vmatpush1.bf16.msra.mxu0 0
  %298 = vmatprep.subr.bf16.mxu0 0
  %299 = vmatpush1.bf16.msra.mxu0 %v275
  %300 = vmatprep.subr.bf16.mxu0 0
  %301 = vmatpush1.bf16.msra.mxu0 %v274
  %302 = vmatprep.subr.bf16.mxu0 0
  %303 = vmatpush2.bf16.msra.mxu0 0
  %304 = vmatprep.subr.bf16.mxu0 0
  %305 = vmatpush2.bf16.msra.mxu0 0
  %306 = vmatprep.subr.bf16.mxu0 0
  %307 = vmatpush2.bf16.msra.mxu0 0
  %308 = vmatprep.subr.bf16.mxu0 0
  %309 = vmatpush2.bf16.msra.mxu0 0
  %310 = vmatprep.subr.bf16.mxu0 0
  %311 = vmatpush2.bf16.msra.mxu0 0
  %312 = vmatprep.subr.bf16.mxu0 0
  %313 = vmatpush2.bf16.msra.mxu0 0
  %314 = vmatprep.subr.bf16.mxu0 0
  %315 = vmatpush2.bf16.msra.mxu0 0
  %316 = vmatprep.subr.bf16.mxu0 0
  %317 = vmatpush2.bf16.msra.mxu0 0
  %318 = vmatprep.mubr.bf16.mxu0 0
  %319 = vmatmul.mubr.bf16.gmra.mxu0 %v284
  %v320 = vpop.f32.mrf.mxu0
  %v321 = vadd.f32 %v281, %v320
  %v322 = vpop.f32.mrf.mxu0
  %v323 = vpop.f32.mrf.mxu0
  %v324 = vpop.f32.mrf.mxu0
  %325 = vdwg.mxu0
  %s326 = smul.u32 0, 8
  %s327 = scalar_lea.vmem [#allocation4], %s326
  %328 = vst [vmem:[%s327] sm:$0xff] %v321
  %p329 = scmp.eq.s32.totalorder 0, 0
  // Predicated region
  $region34: #{_forward_impl.1} parent=0 // pred_check
    %p330 = pneg %p329
  $region35: #{_forward_impl.1} parent=0 // pred_check_branch
    %332 = sbr.rel (%p330) target = $region37
  $region36: #{_forward_impl.1} parent=0 // pred_region
    %vm333 = vcmask 7168
    %334 = vst.msk [vmem:[#allocation2] sm:$0xff] %vm333, -inf
    %335 = vst.msk [vmem:[#allocation3] sm:$0xff] %vm333, 0.0
  $region37: #{_forward_impl.1} parent=0 // pred_fallthru
    _
  %s336 = smul.u32 0, 128
  %v337 = vlaneseq
  %v338 = vand.u32 %v337, 127
  %v339 = vstv %s336
  %v340 = vadd.s32 %v339, %v338
  %vm341 = vcmp.lt.s32.totalorder %v340, 8
  %v342 = vsel %vm341, 1, 0
  %vm343 = vcmp.eq.s32.totalorder %v342, 1
  %v344 = vsel %vm343, %v321, -inf
  %v345 = vld [vmem:[#allocation2] sm:$0xff]
  %346 = vmax.xlane.f32.xlu0 %v344
  %v347 = vpop.xlane.xlu0 %346
  %v348 = vmax.f32 %v345, %v347
  %v349 = vld [vmem:[#allocation3] sm:$0xff]
  %v350 = vsub.f32 %v345, %v348
  %v351 = vmul.f32 %v350, 1.442695
  %v352 = vpow.pop %v351
  %v353 = vmul.f32 %v349, %v352
  %355 = vset.pattern.permute.xlu0 0
  %356 = vperm.xlu0 %355, %v348
  %v357 = vpop.permute.xlu0 %356
  %v359 = vsub.f32 %v344, %v357
  %v360 = vmul.f32 %v359, 1.442695
  %v361 = vpow.pop %v360
  %362 = vadd.xlane.f32.xlu0 %v361
  %v363 = vpop.xlane.xlu0 %362
  %v364 = vadd.f32 %v353, %v363
  %vm365 = vcmask 7168
  %366 = vst.msk [vmem:[#allocation3] sm:$0xff] %vm365, %v364
  %367 = vst.msk [vmem:[#allocation2] sm:$0xff] %vm365, %v348
  // Predicated region
  $region38: #{_forward_impl.1} parent=0 // pred_check
    %p368 = pneg %p329
  $region39: #{_forward_impl.1} parent=0 // pred_check_branch
    %370 = sbr.rel (%p368) target = $region41
  $region40: #{_forward_impl.1} parent=0 // pred_region
    %v371 = vld [vmem:[#allocation2] sm:$0xff]
    %v372 = vld [vmem:[#allocation3] sm:$0xff]
    %v373 = vlog2.pop %v372
    %v374 = vmul.f32 %v373, 0.6931472
    %v375 = vadd.f32 %v371, %v374
    %v376 = vld [vmem:[#allocation4] sm:$0xff]
    %378 = vset.pattern.permute.xlu0 0
    %379 = vperm.xlu0 %378, %v375
    %v380 = vpop.permute.xlu0 %379
    %v382 = vsub.f32 %v376, %v380
    %v383 = vrot.slane %v382, 4
    %v384 = vmax.f32 %v382, %v383
    %v385 = vrot.slane %v384, 2
    %v386 = vmax.f32 %v384, %v385
    %v387 = vrot.slane %v386, 1
    %v388 = vmax.f32 %v386, %v387
    %v389 = vsub.f32 %v382, %v388
    %v390 = vmul.f32 %v389, 1.442695
    %v391 = vpow.pop %v390
    %v392 = vrot.slane %v391, 4
    %v393 = vadd.f32 %v391, %v392
    %v394 = vrot.slane %v393, 2
    %v395 = vadd.f32 %v393, %v394
    %v396 = vrot.slane %v395, 1
    %v397 = vadd.f32 %v395, %v396
    %v398 = vlog2.pop %v397
    %v399 = vmul.f32 %v398, 0.6931472
    %v400 = vadd.f32 %v388, %v399
    %v401 = vld [vmem:[%s1] sm:$0xff]
    %v402 = vadd.f32 %v382, %v401
    %v403 = vrot.slane %v402, 4
    %v404 = vmax.f32 %v402, %v403
    %v405 = vrot.slane %v404, 2
    %v406 = vmax.f32 %v404, %v405
    %v407 = vrot.slane %v406, 1
    %v408 = vmax.f32 %v406, %v407
    %v409 = vlaneseq
    %v410 = vshrl.u32 %v409, 7
    %vm411 = vcmp.eq.f32.partialorder %v402, %v408
    %v412 = vsel %vm411, %v410, 8
    %v413 = vrot.slane %v412, 4
    %vm414 = vcmp.lt.s32.totalorder %v412, %v413
    %v415 = vsel %vm414, %v412, %v413
    %v416 = vrot.slane %v415, 2
    %vm417 = vcmp.lt.s32.totalorder %v415, %v416
    %v418 = vsel %vm417, %v415, %v416
    %v419 = vrot.slane %v418, 1
    %vm420 = vcmp.lt.s32.totalorder %v418, %v419
    %v421 = vsel %vm420, %v418, %v419
    %vm422 = vcmp.eq.s32.totalorder %v410, %v421
    %423 = vst [vmem:[%s8] sm:$0x1] %v421
    %v424 = vsel %vm422, %v382, 0.0
    %v425 = vrot.slane %v424, 4
    %v426 = vadd.f32 %v424, %v425
    %v427 = vrot.slane %v426, 2
    %v428 = vadd.f32 %v426, %v427
    %v429 = vrot.slane %v428, 1
    %v430 = vadd.f32 %v428, %v429
    %v431 = vsub.f32 %v430, %v400
    %432 = vst [vmem:[%s9] sm:$0x1] %v431
  $region41: #{_forward_impl.1} parent=0 // pred_fallthru
    _
  // Predicated region
  $region42: #{_forward_impl.1} parent=0 // pred_check
    _
  $region43: #{_forward_impl.1} parent=0 // pred_check_branch
    %434 = sbr.rel (0) target = $region45
  $region44: #{_forward_impl.1} parent=0 // pred_region
    _
  $region45: #{_forward_impl.1} parent=0 // pred_fallthru
    _
  // Predicated region
  $region46: #{_forward_impl.1} parent=0 // pred_check
    _
  $region47: #{_forward_impl.1} parent=0 // pred_check_branch
    %436 = sbr.rel (0) target = $region49
  $region48: #{_forward_impl.1} parent=0 // pred_region
    _
  $region49: #{_forward_impl.1} parent=0 // pred_fallthru
    _
  // Predicated region
  $region50: #{_forward_impl.1} parent=0 // pred_check
    _
  $region51: #{_forward_impl.1} parent=0 // pred_check_branch
    %438 = sbr.rel (0) target = $region53
  $region52: #{_forward_impl.1} parent=0 // pred_region
    _
  $region53: #{_forward_impl.1} parent=0 // pred_fallthru
    _
  // Predicated region
  $region54: #{_forward_impl.1} parent=0 // pred_check
    _
  $region55: #{_forward_impl.1} parent=0 // pred_check_branch
    %440 = sbr.rel (0) target = $region57
  $region56: #{_forward_impl.1} parent=0 // pred_region
    _
  $region57: #{_forward_impl.1} parent=0 // pred_fallthru
    _

</llo_original>
